<compile_context>
chip_gen: v5e
topology: v5e:2x2
jax: 0.10.0
libtpu: 0.0.40
codegen_flags: <defaults>
</compile_context>

<pallas_src>
import jax
import jax.numpy as jnp
from jax import lax
from jax.experimental import pallas as pl
from jax.experimental.pallas import tpu as pltpu


_TN = 128            # cloud-1 tile (sublane dim, multiple of 8)
_TM_CHUNK = 128      # in-kernel cloud-2 chunk (lane dim, multiple of 128)
_PAD_SENTINEL = 1e8  # padded points live far away -> never a nearest neighbor


def _round_up(x, m):
    return ((x + m - 1) // m) * m


def _chamfer_kernel(x1_ref, x2t_ref, d1_ref, d2_ref):
    # x1_ref : (TN, 3)       tile of cloud-1 points (sublane-oriented)
    # x2t_ref: (3, M_pad)    ALL cloud-2 coords, pre-transposed, VMEM-resident
    # d1_ref : (TN, 1)       min_j ||x1_i - x2_j||^2 for this i-tile
    # d2_ref : (1, M_pad)    min_i ||x1_i - x2_j||^2, resident across the i axis
    ii = pl.program_id(2)
    tn = x1_ref.shape[0]
    m_pad = x2t_ref.shape[1]
    n_chunks = m_pad // _TM_CHUNK

    x1 = x1_ref[...]                 # (TN, 3) f32, loaded once per i-tile
    a0 = x1[:, 0:1]                  # (TN, 1) sublane vectors, hoisted out of
    a1 = x1[:, 1:2]                  # the M sweep
    a2 = x1[:, 2:3]

    # dist2 accumulator lives in the resident output block; initialize it once
    # per (batch, split) at the first i step.  (Init cost is amortized over the
    # whole n_i x M sweep, so the inf-init + min pattern is fine here.)
    @pl.when(ii == 0)
    def _():
        d2_ref[...] = jnp.full(d2_ref.shape, jnp.inf, dtype=jnp.float32)

    def chunk_body(c, acc):
        off = pl.multiple_of(c * _TM_CHUNK, _TM_CHUNK)
        b = x2t_ref[:, pl.ds(off, _TM_CHUNK)]            # (3, TMC) lane-dense
        e0 = a0 - b[0:1, :]                              # (TN, TMC)
        e1 = a1 - b[1:2, :]
        e2 = a2 - b[2:3, :]
        d = e0 * e0 + e1 * e1 + e2 * e2                  # exact L2^2 chunk

        # dist2: nearest cloud-1 point (so far) for each cloud-2 point of this
        # chunk -- cheap sublane reduction folded into the resident block.
        col_min = jnp.min(d, axis=0, keepdims=True)      # (1, TMC)
        d2_ref[:, pl.ds(off, _TM_CHUNK)] = jnp.minimum(
            d2_ref[:, pl.ds(off, _TM_CHUNK)], col_min)

        # dist1: element-wise running min; the cross-lane reduction is deferred
        # to after the loop (one XLU pass per i-tile instead of one per chunk).
        return jnp.minimum(acc, d)

    acc0 = jnp.full((tn, _TM_CHUNK), jnp.inf, dtype=jnp.float32)
    unroll = True if n_chunks <= 4 else False
    acc = lax.fori_loop(0, n_chunks, chunk_body, acc0, unroll=unroll)

    d1_ref[...] = jnp.min(acc, axis=1, keepdims=True)    # (TN, 1)


def chamfer_raw(xyz1, xyz2):
    """Returns (dist1 [B,N], dist2 [B,M]) of squared nearest-neighbor dists."""
    B, N, C = xyz1.shape
    _, M, _ = xyz2.shape
    assert C == 3

    tn = min(_TN, _round_up(N, 8))
    n_pad = _round_up(N, tn)
    n_tiles = n_pad // tn
    # 2-way i-split ("parallel") for single-batch workloads on multi-core chips
    # (v7x / megacore).  Only when the tile count splits evenly: zero padding
    # waste on single-core chips, pure win on 2-TC chips.
    G = 2 if (B == 1 and n_tiles >= 2 and n_tiles % 2 == 0) else 1
    NI = n_tiles // G

    m_pad = _round_up(M, _TM_CHUNK)
    assert m_pad % _TM_CHUNK == 0

    x1 = xyz1.astype(jnp.float32)
    x2 = xyz2.astype(jnp.float32)

    # Pad the point axes to tile multiples; padded points sit at a far-away
    # sentinel so they never win a min against real points.
    # NOTE: assumes real coordinate magnitudes << 1e8 (sentinel^2 = 1e16 must
    # dominate real squared distances in f32).
    if n_pad > N:
        pad = jnp.zeros((B, n_pad - N, 3), jnp.float32).at[:, :, 0].set(_PAD_SENTINEL)
        x1 = jnp.concatenate([x1, pad], axis=1)
    if m_pad > M:
        pad = jnp.zeros((B, m_pad - M, 3), jnp.float32).at[:, :, 0].set(_PAD_SENTINEL)
        x2 = jnp.concatenate([x2, pad], axis=1)

    # Lane-dense layout for cloud 2: each coordinate becomes a (1, M_pad) row.
    x2t = jnp.transpose(x2, (0, 2, 1))   # (B, 3, M_pad)

    cost = pl.CostEstimate(
        flops=int(11 * B * n_pad * m_pad),
        transcendentals=0,
        bytes_accessed=int(4 * B * (3 * n_pad + 3 * m_pad + n_pad + G * m_pad)),
    )

    d1, d2 = pl.pallas_call(
        _chamfer_kernel,
        out_shape=(
            jax.ShapeDtypeStruct((B, n_pad, 1), jnp.float32),
            jax.ShapeDtypeStruct((B, G, 1, m_pad), jnp.float32),
        ),
        grid_spec=pltpu.PrefetchScalarGridSpec(
            num_scalar_prefetch=0,
            grid=(B, G, NI),
            in_specs=[
                # cloud-1 tile for this (split, i) step
                pl.BlockSpec((None, tn, 3), lambda b, g, i: (b, g * NI + i, 0)),
                # whole cloud-2 (transposed): resident across g and i
                pl.BlockSpec((None, 3, m_pad), lambda b, g, i: (b, 0, 0)),
            ],
            out_specs=[
                pl.BlockSpec((None, tn, 1), lambda b, g, i: (b, g * NI + i, 0)),
                # dist2 block resident across the i (reduction) axis
                pl.BlockSpec((None, None, 1, m_pad), lambda b, g, i: (b, g, 0, 0)),
            ],
        ),
        compiler_params=pltpu.CompilerParams(
            dimension_semantics=("parallel", "parallel", "arbitrary"),
            vmem_limit_bytes=32 * 1024 * 1024,
        ),
        cost_estimate=cost,
    )(x1, x2t)

    dist1 = d1[:, :N, 0]
    dist2 = jnp.min(d2[:, :, 0, :], axis=1)[:, :M]   # combine the G partials
    return dist1, dist2


def chamfer_distance_l2_split(xyz1, xyz2, weights1=None, weights2=None,
                              ignore_zeros=False):
    """Forward pass of ChamferDistanceL2_split. Returns (dist1_avg, dist2_avg)."""
    # TODO(synk): ignore_zeros path (batch==1) drops all-zero points and gives
    # data-dependent shapes; not implemented here.
    dist1, dist2 = chamfer_raw(xyz1, xyz2)

    if weights1 is not None:
        w1 = weights1
        if w1.ndim == 3 and w1.shape[2] == 1:
            w1 = w1[..., 0]
        if w1.ndim == 2:
            dist1 = dist1 * w1
        dist1_avg = jnp.sum(dist1) / jnp.sum(weights1)
    else:
        dist1_avg = jnp.mean(dist1)

    if weights2 is not None:
        w2 = weights2
        if w2.ndim == 3 and w2.shape[2] == 1:
            w2 = w2[..., 0]
        if w2.ndim == 2:
            dist2 = dist2 * w2
        dist2_avg = jnp.sum(dist2) / jnp.sum(weights2)
    else:
        dist2_avg = jnp.mean(dist2)

    return dist1_avg, dist2_avg


def _chamfer_ref(xyz1, xyz2):
    # Pure-JAX reference for correctness checks.
    diff = xyz1[:, :, None, :] - xyz2[:, None, :, :]      # (B, N, M, 3)
    d = jnp.sum(diff * diff, axis=-1)                     # (B, N, M)
    return jnp.min(d, axis=2), jnp.min(d, axis=1)


if __name__ == "__main__":
    key = jax.random.PRNGKey(0)
    k1, k2, k3, k4, k5, k6, k7, k8 = jax.random.split(key, 8)

    # --- test 1: typical usage (B=2), padding on M, weighted & unweighted ---
    B, N, M = 2, 128, 96
    xyz1 = jax.random.normal(k1, (B, N, 3), dtype=jnp.float32)
    xyz2 = jax.random.normal(k2, (B, M, 3), dtype=jnp.float32)
    weights1 = jax.random.uniform(k3, (B, N), dtype=jnp.float32) + 0.1
    weights2 = jax.random.uniform(k4, (B, M), dtype=jnp.float32) + 0.1

    d1_avg, d2_avg = chamfer_distance_l2_split(xyz1, xyz2)
    d1_avg_w, d2_avg_w = chamfer_distance_l2_split(xyz1, xyz2, weights1, weights2)
    jax.block_until_ready((d1_avg, d2_avg, d1_avg_w, d2_avg_w))

    dist1_k, dist2_k = chamfer_raw(xyz1, xyz2)
    dist1_r, dist2_r = _chamfer_ref(xyz1, xyz2)
    assert jnp.allclose(dist1_k, dist1_r, rtol=1e-5, atol=1e-5)
    assert jnp.allclose(dist2_k, dist2_r, rtol=1e-5, atol=1e-5)
    assert jnp.allclose(d1_avg, jnp.mean(dist1_r), rtol=1e-5, atol=1e-5)
    assert jnp.allclose(d2_avg, jnp.mean(dist2_r), rtol=1e-5, atol=1e-5)
    assert jnp.allclose(
        d1_avg_w, jnp.sum(dist1_r * weights1) / jnp.sum(weights1),
        rtol=1e-5, atol=1e-5)
    assert jnp.allclose(
        d2_avg_w, jnp.sum(dist2_r * weights2) / jnp.sum(weights2),
        rtol=1e-5, atol=1e-5)

    # --- test 2: ragged sizes, multi i-tile, multi M-chunk (G = 1 path) ---
    B2, N2, M2 = 1, 300, 600    # -> 3 i-tiles (odd -> no split), 5 M-chunks
    xa = jax.random.normal(k5, (B2, N2, 3), dtype=jnp.float32)
    xb = jax.random.normal(k6, (B2, M2, 3), dtype=jnp.float32)
    da_k, db_k = chamfer_raw(xa, xb)
    da_r, db_r = _chamfer_ref(xa, xb)
    jax.block_until_ready((da_k, db_k))
    assert jnp.allclose(da_k, da_r, rtol=1e-5, atol=1e-5)
    assert jnp.allclose(db_k, db_r, rtol=1e-5, atol=1e-5)

    # --- test 3: B == 1 with even tile count -> 2-way i-split (G = 2 path) ---
    B3, N3, M3 = 1, 256, 384
    xc = jax.random.normal(k7, (B3, N3, 3), dtype=jnp.float32)
    xd = jax.random.normal(k8, (B3, M3, 3), dtype=jnp.float32)
    dc_k, dd_k = chamfer_raw(xc, xd)
    dc_r, dd_r = _chamfer_ref(xc, xd)
    jax.block_until_ready((dc_k, dd_k))
    assert jnp.allclose(dc_k, dc_r, rtol=1e-5, atol=1e-5)
    assert jnp.allclose(dd_k, dd_r, rtol=1e-5, atol=1e-5)

    print("KERNEL_OK")
</pallas_src>

<mosaic_0001>
module attributes {stable_mosaic.version = 11 : i64} {
  func.func @_chamfer_kernel(%arg0: i32, %arg1: i32, %arg2: i32, %arg3: memref<1x128x3xf32, #tpu.memory_space<vmem>>, %arg4: memref<1x3x128xf32, #tpu.memory_space<vmem>>, %arg5: memref<1x128x1xf32, #tpu.memory_space<vmem>>, %arg6: memref<1x1x1x128xf32, #tpu.memory_space<vmem>>) attributes {dimension_semantics = [#tpu.dimension_semantics<parallel>, #tpu.dimension_semantics<parallel>, #tpu.dimension_semantics<arbitrary>], iteration_bounds = array<i64: 2, 1, 1>, scalar_prefetch = 0 : i64, scratch_operands = 0 : i64, tpu.core_type = #tpu.core_type<tc>, window_params = [{transform_indices = @transform_0, window_bounds = array<i64: 1, 128, 3>}, {transform_indices = @transform_1, window_bounds = array<i64: 1, 3, 128>}, {transform_indices = @transform_2, window_bounds = array<i64: 1, 128, 1>}, {transform_indices = @transform_3, window_bounds = array<i64: 1, 1, 1, 128>}]} {
    %c0 = arith.constant 0 : index
    %c0_0 = arith.constant 0 : index
    %c0_1 = arith.constant 0 : index
    %0 = vector.load %arg3[%c0, %c0_0, %c0_1] : memref<1x128x3xf32, #tpu.memory_space<vmem>>, vector<1x128x3xf32>
    %1 = vector.shape_cast %0 : vector<1x128x3xf32> to vector<128x3xf32>
    %2 = vector.extract_strided_slice %1 {offsets = [0, 0], sizes = [128, 1], strides = [1, 1]} : vector<128x3xf32> to vector<128x1xf32>
    %3 = vector.extract_strided_slice %1 {offsets = [0, 1], sizes = [128, 1], strides = [1, 1]} : vector<128x3xf32> to vector<128x1xf32>
    %4 = vector.extract_strided_slice %1 {offsets = [0, 2], sizes = [128, 1], strides = [1, 1]} : vector<128x3xf32> to vector<128x1xf32>
    %c0_i32 = arith.constant 0 : i32
    %5 = arith.cmpi eq, %arg2, %c0_i32 : i32
    %6 = arith.extui %5 : i1 to i32
    %c0_i32_2 = arith.constant 0 : i32
    %7 = arith.cmpi ne, %6, %c0_i32_2 : i32
    scf.if %7 {
      %cst_17 = arith.constant 0x7F800000 : f32
      %47 = vector.broadcast %cst_17 : f32 to vector<1x128xf32>
      %c0_18 = arith.constant 0 : index
      %c0_19 = arith.constant 0 : index
      %c0_20 = arith.constant 0 : index
      %c0_21 = arith.constant 0 : index
      %48 = vector.load %arg6[%c0_18, %c0_19, %c0_20, %c0_21] : memref<1x1x1x128xf32, #tpu.memory_space<vmem>>, vector<1x1x1x128xf32>
      %49 = vector.shape_cast %48 : vector<1x1x1x128xf32> to vector<1x128xf32>
      %50 = vector.shape_cast %47 : vector<1x128xf32> to vector<1x1x1x128xf32>
      tpu.vector_store %arg6[%c0_18, %c0_19, %c0_20, %c0_21], %50 {strides = array<i32>} : memref<1x1x1x128xf32, #tpu.memory_space<vmem>>, vector<1x1x1x128xf32>,
    } else {
    }
    %cst = arith.constant 0x7F800000 : f32
    %8 = vector.broadcast %cst : f32 to vector<128x128xf32>
    %c0_i32_3 = arith.constant 0 : i32
    %c128_i32 = arith.constant 128 : i32
    %9 = arith.muli %c0_i32_3, %c128_i32 : i32
    %10 = tpu.assume_multiple %9, 128 : i32
    %c0_4 = arith.constant 0 : index
    %c0_5 = arith.constant 0 : index
    %11 = arith.index_cast %10 : i32 to index
    %12 = vector.load %arg4[%c0_4, %c0_5, %11] : memref<1x3x128xf32, #tpu.memory_space<vmem>>, vector<1x3x128xf32>
    %13 = vector.shape_cast %12 : vector<1x3x128xf32> to vector<3x128xf32>
    %14 = vector.extract_strided_slice %13 {offsets = [0, 0], sizes = [1, 128], strides = [1, 1]} : vector<3x128xf32> to vector<1x128xf32>
    %15 = vector.broadcast %2 : vector<128x1xf32> to vector<128x128xf32>
    %16 = vector.broadcast %14 : vector<1x128xf32> to vector<128x128xf32>
    %17 = arith.subf %15, %16 : vector<128x128xf32>
    %18 = vector.extract_strided_slice %13 {offsets = [1, 0], sizes = [1, 128], strides = [1, 1]} : vector<3x128xf32> to vector<1x128xf32>
    %19 = vector.broadcast %3 : vector<128x1xf32> to vector<128x128xf32>
    %20 = vector.broadcast %18 : vector<1x128xf32> to vector<128x128xf32>
    %21 = arith.subf %19, %20 : vector<128x128xf32>
    %22 = vector.extract_strided_slice %13 {offsets = [2, 0], sizes = [1, 128], strides = [1, 1]} : vector<3x128xf32> to vector<1x128xf32>
    %23 = vector.broadcast %4 : vector<128x1xf32> to vector<128x128xf32>
    %24 = vector.broadcast %22 : vector<1x128xf32> to vector<128x128xf32>
    %25 = arith.subf %23, %24 : vector<128x128xf32>
    %26 = arith.mulf %17, %17 : vector<128x128xf32>
    %27 = arith.mulf %21, %21 : vector<128x128xf32>
    %28 = arith.addf %26, %27 : vector<128x128xf32>
    %29 = arith.mulf %25, %25 : vector<128x128xf32>
    %30 = arith.addf %28, %29 : vector<128x128xf32>
    %cst_6 = arith.constant dense<0x7F800000> : vector<128xf32>
    %31 = vector.multi_reduction <minimumf>, %30, %cst_6 [0] : vector<128x128xf32> to vector<128xf32>
    %32 = vector.shape_cast %31 : vector<128xf32> to vector<1x128xf32>
    %c0_7 = arith.constant 0 : index
    %c0_8 = arith.constant 0 : index
    %c0_9 = arith.constant 0 : index
    %33 = arith.index_cast %10 : i32 to index
    %34 = vector.load %arg6[%c0_7, %c0_8, %c0_9, %33] : memref<1x1x1x128xf32, #tpu.memory_space<vmem>>, vector<1x1x1x128xf32>
    %35 = vector.shape_cast %34 : vector<1x1x1x128xf32> to vector<1x128xf32>
    %36 = arith.minimumf %35, %32 : vector<1x128xf32>
    %c0_10 = arith.constant 0 : index
    %c0_11 = arith.constant 0 : index
    %c0_12 = arith.constant 0 : index
    %37 = arith.index_cast %10 : i32 to index
    %38 = vector.load %arg6[%c0_10, %c0_11, %c0_12, %37] : memref<1x1x1x128xf32, #tpu.memory_space<vmem>>, vector<1x1x1x128xf32>
    %39 = vector.shape_cast %38 : vector<1x1x1x128xf32> to vector<1x128xf32>
    %40 = vector.shape_cast %36 : vector<1x128xf32> to vector<1x1x1x128xf32>
    tpu.vector_store %arg6[%c0_10, %c0_11, %c0_12, %37], %40 {strides = array<i32>} : memref<1x1x1x128xf32, #tpu.memory_space<vmem>>, vector<1x1x1x128xf32>,
    %41 = arith.minimumf %8, %30 : vector<128x128xf32>
    %c1_i32 = arith.constant 1 : i32
    %cst_13 = arith.constant dense<0x7F800000> : vector<128xf32>
    %42 = vector.multi_reduction <minimumf>, %41, %cst_13 [1] : vector<128x128xf32> to vector<128xf32>
    %43 = vector.shape_cast %42 : vector<128xf32> to vector<128x1xf32>
    %c0_14 = arith.constant 0 : index
    %c0_15 = arith.constant 0 : index
    %c0_16 = arith.constant 0 : index
    %44 = vector.load %arg5[%c0_14, %c0_15, %c0_16] : memref<1x128x1xf32, #tpu.memory_space<vmem>>, vector<1x128x1xf32>
    %45 = vector.shape_cast %44 : vector<1x128x1xf32> to vector<128x1xf32>
    %46 = vector.shape_cast %43 : vector<128x1xf32> to vector<1x128x1xf32>
    tpu.vector_store %arg5[%c0_14, %c0_15, %c0_16], %46 {strides = array<i32>} : memref<1x128x1xf32, #tpu.memory_space<vmem>>, vector<1x128x1xf32>,
    return
  }
  func.func @transform_0(%arg0: i32, %arg1: i32, %arg2: i32) -> (i32, i32, i32) {
    %c1_i32 = arith.constant 1 : i32
    %0 = arith.muli %arg1, %c1_i32 : i32
    %1 = arith.addi %0, %arg2 : i32
    %c0_i32 = arith.constant 0 : i32
    %c0_i32_0 = arith.constant 0 : i32
    return %arg0, %1, %c0_i32 : i32, i32, i32
  }
  func.func @transform_1(%arg0: i32, %arg1: i32, %arg2: i32) -> (i32, i32, i32) {
    %c0_i32 = arith.constant 0 : i32
    %c0_i32_0 = arith.constant 0 : i32
    %c0_i32_1 = arith.constant 0 : i32
    return %arg0, %c0_i32, %c0_i32_0 : i32, i32, i32
  }
  func.func @transform_2(%arg0: i32, %arg1: i32, %arg2: i32) -> (i32, i32, i32) {
    %c1_i32 = arith.constant 1 : i32
    %0 = arith.muli %arg1, %c1_i32 : i32
    %1 = arith.addi %0, %arg2 : i32
    %c0_i32 = arith.constant 0 : i32
    %c0_i32_0 = arith.constant 0 : i32
    return %arg0, %1, %c0_i32 : i32, i32, i32
  }
  func.func @transform_3(%arg0: i32, %arg1: i32, %arg2: i32) -> (i32, i32, i32, i32) {
    %c0_i32 = arith.constant 0 : i32
    %c0_i32_0 = arith.constant 0 : i32
    %c0_i32_1 = arith.constant 0 : i32
    return %arg0, %arg1, %c0_i32, %c0_i32_0 : i32, i32, i32, i32
  }
}

</mosaic_0001>

<llo_original>
// kernel: tpu_custom_call.1
$region0: #{tpu_custom_call.1}
  #allocation0 [shape = 'u32[]', space=smem, size = 0x4, offset = 0x4, fixed_abs, tag = 'smem constant byte address 0x4 - core index']
  #allocation1 [shape = 'u32[72,128]{1,0:T(1,128)}', space=vmem, size = 0x9000, scoped, tag = 'internal scratch']
  %s0 = inlined_call_operand.vmem [shape: f32[2,128,3], index: 0, kind: input, shape index: {}]
  %s1 = inlined_call_operand.vmem [shape: f32[2,3,128], index: 1, kind: input, shape index: {}]
  %s2 = inlined_call_operand.vmem [shape: f32[2,128,1], index: 2, kind: output, shape index: {0}]
  %s3 = inlined_call_operand.hbm [shape: f32[2,1,1,128], index: 3, kind: output, shape index: {1}]
  %4 = xla_tuple %s2, %s3
  %s5 = sld [smem:[#allocation0]]
  $region53: #{tpu_custom_call.1} parent=0
    _
  %s7 = ssub.s32 1, %s5
  %s8 = scalar_select 0, %s7, %s5
  $region1: #{tpu_custom_call.1} parent=0
    #allocation2 [shape = 'u8[1024]{0}', space=vmem, size = 0x400, scoped, tag = 'output window, operand 1']
    #allocation3 [shape = 's32[2]{0}', space=sflag, size = 0x8, scoped, tag = 'scoped memory for tpu_custom_call.1']
    %9 = vsyncpa [#allocation3], 0
    %s10 = scalar_lea.sflag [#allocation3], 1
    %11 = vsyncpa %s10, 0
    loop: start=0, step=1, limit=4
    $region2: #{tpu_custom_call.1} parent=1 // loop_pre_header
      _
    $region3: #{tpu_custom_call.1} parent=1 // loop_header
      %s13 = sphi 0, %s17
      %p14 = scmp.ge.s32.totalorder %s13, 4
      %s20 = sphi 0, %s39
      %s21 = sphi 0, %s35
      %s22 = sphi 0, %s31
      %s23 = sphi 0, %s20
      %s24 = sphi 0, %s21
      %s25 = sphi 0, %s22
      %s26 = sphi 0, %s23
      %s27 = sphi 0, %s24
      %s28 = sphi 0, %s25
      %s46 = sphi 0, %s48
      %s49 = sphi 0, %s46
      %s50 = sphi 0, %s49
      %s66 = sphi 0, %s50
      %s72 = sphi 0, %s74
      %s75 = sphi 0, %s72
      %s76 = sphi 0, %s75
      %s92 = sphi 0, %s76
      %s102 = sphi 0, %s104
      %s105 = sphi 0, %s102
      %s106 = sphi 0, %s105
      %s122 = sphi 0, %s106
      %s130 = sphi 0, %s132
      %s133 = sphi 0, %s130
      %s134 = sphi 0, %s133
      %s150 = sphi 0, %s134
    $region4: #{tpu_custom_call.1} parent=1 // loop_header_branch
      %16 = sbr.rel (%p14) target = $region8
    $region5: #{tpu_custom_call.1} parent=1 // loop_body
      %s18 = ssub.s32 %s13, 1
      %s19 = ssub.s32 %s13, 2
      %s29 = sadd.s32 1, %s22
      %p30 = scmp.ge.s32.totalorder %s29, 1
      %s31 = scalar_select %p30, 0, %s29
      %s32 = sadd.s32 1, %s21
      %s33 = scalar_select %p30, %s32, %s21
      %p34 = scmp.ge.s32.totalorder %s33, 1
      %s35 = scalar_select %p34, 0, %s33
      %s36 = sadd.s32 1, %s20
      %s37 = scalar_select %p34, %s36, %s20
      %p38 = scmp.ge.s32.totalorder %s37, 2
      %s39 = scalar_select %p38, 0, %s37
      %s40 = sadd.s32 %s21, %s22
      %s41 = sadd.s32 %s35, %s31
      %s42 = ssub.s32 %s20, %s39
      %s43 = ssub.s32 %s40, %s41
      %s44 = sor.u32 %s42, %s43
      %p45 = scmp.eq.s32.totalorder %s44, 0
      %s47 = sadd.s32 %s46, 1
      %s48 = scalar_select %p45, %s46, %s47
      %p51 = pneg %p45
      %p52 = scmp.eq.s32.totalorder %s13, 1
      %p53 = por %p51, %p52
      %p54 = scmp.ne.s32.totalorder %s46, %s49
      %p55 = scmp.eq.s32.totalorder %s13, 0
      %p56 = por %p54, %p55
      %p57 = scmp.ne.s32.totalorder %s46, %s49
      %p58 = scmp.eq.s32.totalorder %s18, 1
      %p59 = por %p57, %p58
      %p60 = scmp.ne.s32.totalorder %s49, %s50
      %p61 = scmp.eq.s32.totalorder %s18, 0
      %p62 = por %p60, %p61
      %p63 = scmp.ne.s32.totalorder %s49, %s50
      %p64 = scmp.eq.s32.totalorder %s19, 1
      %p65 = por %p63, %p64
      %p67 = scmp.ne.s32.totalorder %s50, %s66
      %p68 = scmp.eq.s32.totalorder %s19, 0
      %p69 = por %p67, %p68
      %s70 = ssub.s32 %s20, %s39
      %p71 = scmp.eq.s32.totalorder %s70, 0
      %s73 = sadd.s32 %s72, 1
      %s74 = scalar_select %p71, %s72, %s73
      %p77 = pneg %p71
      %p78 = scmp.eq.s32.totalorder %s13, 1
      %p79 = por %p77, %p78
      %p80 = scmp.ne.s32.totalorder %s72, %s75
      %p81 = scmp.eq.s32.totalorder %s13, 0
      %p82 = por %p80, %p81
      %p83 = scmp.ne.s32.totalorder %s72, %s75
      %p84 = scmp.eq.s32.totalorder %s18, 1
      %p85 = por %p83, %p84
      %p86 = scmp.ne.s32.totalorder %s75, %s76
      %p87 = scmp.eq.s32.totalorder %s18, 0
      %p88 = por %p86, %p87
      %p89 = scmp.ne.s32.totalorder %s75, %s76
      %p90 = scmp.eq.s32.totalorder %s19, 1
      %p91 = por %p89, %p90
      %p93 = scmp.ne.s32.totalorder %s76, %s92
      %p94 = scmp.eq.s32.totalorder %s19, 0
      %p95 = por %p93, %p94
      %s96 = sadd.s32 %s21, %s22
      %s97 = sadd.s32 %s35, %s31
      %s98 = ssub.s32 %s20, %s39
      %s99 = ssub.s32 %s96, %s97
      %s100 = sor.u32 %s98, %s99
      %p101 = scmp.eq.s32.totalorder %s100, 0
      %s103 = sadd.s32 %s102, 1
      %s104 = scalar_select %p101, %s102, %s103
      %p107 = pneg %p101
      %p108 = scmp.eq.s32.totalorder %s13, 1
      %p109 = por %p107, %p108
      %p110 = scmp.ne.s32.totalorder %s102, %s105
      %p111 = scmp.eq.s32.totalorder %s13, 0
      %p112 = por %p110, %p111
      %p113 = scmp.ne.s32.totalorder %s102, %s105
      %p114 = scmp.eq.s32.totalorder %s18, 1
      %p115 = por %p113, %p114
      %p116 = scmp.ne.s32.totalorder %s105, %s106
      %p117 = scmp.eq.s32.totalorder %s18, 0
      %p118 = por %p116, %p117
      %p119 = scmp.ne.s32.totalorder %s105, %s106
      %p120 = scmp.eq.s32.totalorder %s19, 1
      %p121 = por %p119, %p120
      %p123 = scmp.ne.s32.totalorder %s106, %s122
      %p124 = scmp.eq.s32.totalorder %s19, 0
      %p125 = por %p123, %p124
      %s126 = ssub.s32 %s20, %s39
      %s127 = ssub.s32 %s21, %s35
      %s128 = sor.u32 %s126, %s127
      %p129 = scmp.eq.s32.totalorder %s128, 0
      %s131 = sadd.s32 %s130, 1
      %s132 = scalar_select %p129, %s130, %s131
      %p135 = pneg %p129
      %p136 = scmp.eq.s32.totalorder %s13, 1
      %p137 = por %p135, %p136
      %p138 = scmp.ne.s32.totalorder %s130, %s133
      %p139 = scmp.eq.s32.totalorder %s13, 0
      %p140 = por %p138, %p139
      %p141 = scmp.ne.s32.totalorder %s130, %s133
      %p142 = scmp.eq.s32.totalorder %s18, 1
      %p143 = por %p141, %p142
      %p144 = scmp.ne.s32.totalorder %s133, %s134
      %p145 = scmp.eq.s32.totalorder %s18, 0
      %p146 = por %p144, %p145
      %p147 = scmp.ne.s32.totalorder %s133, %s134
      %p148 = scmp.eq.s32.totalorder %s19, 1
      %p149 = por %p147, %p148
      %p151 = scmp.ne.s32.totalorder %s134, %s150
      %p152 = scmp.eq.s32.totalorder %s19, 0
      %p153 = por %p151, %p152
      %p154 = scmp.le.s32.totalorder 1, %s13
      %p155 = scmp.lt.s32.totalorder %s13, 3
      %p156 = pnand %p154, %p155
      %p157 = pneg %p156
      // Predicated region
      $region9: #{tpu_custom_call.1} parent=5 // pred_check
        _
      $region10: #{tpu_custom_call.1} parent=5 // pred_check_branch
        %159 = sbr.rel (%p156) target = $region12
      $region11: #{tpu_custom_call.1} parent=5 // pred_region
        %s160 = ssub.s32 %s13, 1
      $region12: #{tpu_custom_call.1} parent=5 // pred_fallthru
        _
      %p161 = scmp.lt.s32.totalorder %s13, 2
      // Predicated region
      $region13: #{tpu_custom_call.1} parent=5 // pred_check
        %p162 = pneg %p161
      $region14: #{tpu_custom_call.1} parent=5 // pred_check_branch
        %164 = sbr.rel (%p162) target = $region16
      $region15: #{tpu_custom_call.1} parent=5 // pred_region
        // Predicated region
        $region17: #{tpu_custom_call.1} parent=15 // pred_check
          %p165 = pneg %p56
        $region18: #{tpu_custom_call.1} parent=15 // pred_check_branch
          %167 = sbr.rel (%p165) target = $region20
        $region19: #{tpu_custom_call.1} parent=15 // pred_region
          %s168 = sadd.s32 %s21, %s22
          %s169 = smul.u32 16, %s168
          %p170 = scmp.lt.s32.totalorder %s20, 1
          %s171 = scalar_select %p170, %s20, 1
          %p172 = scmp.lt.s32.totalorder %s169, 15
          %s173 = scalar_select %p172, %s169, 15
          %s174 = smul.addr %s171, 16
          %s175 = sadd.s32 %s173, %s174
          %s176 = smul.addr %s175, 8
          %s177 = scalar_lea.vmem %s0, %s176
          %s178 = sadd.s32 %s21, %s22
          %s179 = smul.u32 16, %s178
        $region20: #{tpu_custom_call.1} parent=15 // pred_fallthru
          _
        // Predicated region
        $region21: #{tpu_custom_call.1} parent=15 // pred_check
          %p180 = pneg %p82
        $region22: #{tpu_custom_call.1} parent=15 // pred_check_branch
          %182 = sbr.rel (%p180) target = $region24
        $region23: #{tpu_custom_call.1} parent=15 // pred_region
          %p183 = scmp.lt.s32.totalorder %s20, 1
          %s184 = scalar_select %p183, %s20, 1
          %s185 = smul.addr %s184, 4
          %s186 = scalar_lea.vmem %s1, %s185
        $region24: #{tpu_custom_call.1} parent=15 // pred_fallthru
          _
      $region16: #{tpu_custom_call.1} parent=5 // pred_fallthru
        _
      %p187 = scmp.le.s32.totalorder 1, %s13
      %p188 = scmp.lt.s32.totalorder %s13, 3
      %p189 = pnand %p187, %p188
      %p190 = pneg %p189
      // Predicated region
      $region25: #{tpu_custom_call.1} parent=5 // pred_check
        _
      $region26: #{tpu_custom_call.1} parent=5 // pred_check_branch
        %192 = sbr.rel (%p189) target = $region28
      $region27: #{tpu_custom_call.1} parent=5 // pred_region
        %s193 = ssub.s32 %s13, 1
        %s194 = sadd.s32 %s24, %s25
        %s195 = smul.u32 16, %s194
        %p196 = scmp.lt.s32.totalorder %s23, 1
        %s197 = scalar_select %p196, %s23, 1
        %p198 = scmp.lt.s32.totalorder %s195, 15
        %s199 = scalar_select %p198, %s195, 15
        %s200 = smul.addr %s197, 16
        %s201 = sadd.s32 %s199, %s200
        %s202 = smul.addr %s201, 8
        %s203 = scalar_lea.vmem %s0, %s202
        %p204 = pneg %p62
        %p205 = pneg %p59
        %p206 = scmp.lt.s32.totalorder %s23, 1
        %s207 = scalar_select %p206, %s23, 1
        %s208 = smul.addr %s207, 4
        %s209 = scalar_lea.vmem %s1, %s208
        %p210 = pneg %p88
        %p211 = pneg %p85
        %p212 = pneg %p118
        %p213 = pneg %p115
        %s214 = sadd.s32 %s24, %s25
        %s215 = smul.u32 16, %s214
        %p216 = scmp.lt.s32.totalorder %s23, 1
        %s217 = scalar_select %p216, %s23, 1
        %p218 = scmp.lt.s32.totalorder %s215, 15
        %s219 = scalar_select %p218, %s215, 15
        %s220 = smul.addr %s217, 16
        %s221 = sadd.s32 %s219, %s220
        %s222 = smul.addr %s221, 8
        %s223 = scalar_lea.vmem %s2, %s222
        %p224 = pneg %p146
        %p225 = pneg %p143
        %s226 = sand.u32 %s133, 1
        %s227 = scalar_lea.sflag [#allocation3], %s226
        %s228 = sand.u32 %s133, 1
        %s229 = scalar_lea.vmem [#allocation2], %s228
        %s230 = sadd.s32 %s24, %s25
        %s231 = smul.u32 16, %s230
        %p232 = scmp.lt.s32.totalorder %s23, 1
        %s233 = scalar_select %p232, %s23, 1
        %p234 = scmp.lt.s32.totalorder %s231, 15
        %s235 = scalar_select %p234, %s231, 15
        %s236 = smul.addr %s233, 16
        %s237 = sadd.s32 %s235, %s236
        %s238 = smul.addr %s237, 8
        %s239 = scalar_lea.vmem %s0, %s238
        %s240 = sadd.s32 %s24, %s25
        %s241 = smul.u32 16, %s240
        %p242 = scmp.lt.s32.totalorder %s23, 1
        %s243 = scalar_select %p242, %s23, 1
        %s244 = smul.addr %s243, 4
        %s245 = scalar_lea.vmem %s1, %s244
        %s246 = sadd.s32 %s24, %s25
        %s247 = smul.u32 16, %s246
        %p248 = scmp.lt.s32.totalorder %s23, 1
        %s249 = scalar_select %p248, %s23, 1
        %p250 = scmp.lt.s32.totalorder %s247, 15
        %s251 = scalar_select %p250, %s247, 15
        %s252 = smul.addr %s249, 16
        %s253 = sadd.s32 %s251, %s252
        %s254 = smul.addr %s253, 8
        %s255 = scalar_lea.vmem %s2, %s254
        %s256 = sadd.s32 %s24, %s25
        %s257 = smul.u32 16, %s256
        %v258 = vld [vmem:[%s239] sm:$0xff]
        %v259 = vld [vmem:[%s239 + $0x8] sm:$0xff]
        %v260 = vld [vmem:[%s239 + $0x10] sm:$0xff]
        %v261 = vld [vmem:[%s239 + $0x18] sm:$0xff]
        %v262 = vld [vmem:[%s239 + $0x20] sm:$0xff]
        %v263 = vld [vmem:[%s239 + $0x28] sm:$0xff]
        %v264 = vld [vmem:[%s239 + $0x30] sm:$0xff]
        %v265 = vld [vmem:[%s239 + $0x38] sm:$0xff]
        %v266 = vld [vmem:[%s239 + $0x40] sm:$0xff]
        %v267 = vld [vmem:[%s239 + $0x48] sm:$0xff]
        %v268 = vld [vmem:[%s239 + $0x50] sm:$0xff]
        %v269 = vld [vmem:[%s239 + $0x58] sm:$0xff]
        %v270 = vld [vmem:[%s239 + $0x60] sm:$0xff]
        %v271 = vld [vmem:[%s239 + $0x68] sm:$0xff]
        %v272 = vld [vmem:[%s239 + $0x70] sm:$0xff]
        %v273 = vld [vmem:[%s239 + $0x78] sm:$0xff]
        %p274 = scmp.eq.s32.totalorder %s25, 0
        // Predicated region
        $region29: #{tpu_custom_call.1} parent=27 // pred_check
          %p275 = pneg %p274
        $region30: #{tpu_custom_call.1} parent=27 // pred_check_branch
          %277 = sbr.rel (%p275) target = $region32
        $region31: #{tpu_custom_call.1} parent=27 // pred_region
          %278 = vst [vmem:[%s229] sm:$0x1] inf
        $region32: #{tpu_custom_call.1} parent=27 // pred_fallthru
          _
        %v279 = vld [vmem:[%s245] sm:$0x7]
        %281 = vset.pattern.permute.xlu0 0
        %282 = vperm.xlu0 %281, %v258
        %v283 = vpop.permute.xlu0 %282
        %286 = vset.pattern.permute.xlu0 0
        %287 = vperm.xlu0 %286, %v259
        %v288 = vpop.permute.xlu0 %287
        %291 = vset.pattern.permute.xlu0 0
        %292 = vperm.xlu0 %291, %v260
        %v293 = vpop.permute.xlu0 %292
        %296 = vset.pattern.permute.xlu0 0
        %297 = vperm.xlu0 %296, %v261
        %v298 = vpop.permute.xlu0 %297
        %301 = vset.pattern.permute.xlu0 0
        %302 = vperm.xlu0 %301, %v262
        %v303 = vpop.permute.xlu0 %302
        %306 = vset.pattern.permute.xlu0 0
        %307 = vperm.xlu0 %306, %v263
        %v308 = vpop.permute.xlu0 %307
        %311 = vset.pattern.permute.xlu0 0
        %312 = vperm.xlu0 %311, %v264
        %v313 = vpop.permute.xlu0 %312
        %316 = vset.pattern.permute.xlu0 0
        %317 = vperm.xlu0 %316, %v265
        %v318 = vpop.permute.xlu0 %317
        %321 = vset.pattern.permute.xlu0 0
        %322 = vperm.xlu0 %321, %v266
        %v323 = vpop.permute.xlu0 %322
        %326 = vset.pattern.permute.xlu0 0
        %327 = vperm.xlu0 %326, %v267
        %v328 = vpop.permute.xlu0 %327
        %331 = vset.pattern.permute.xlu0 0
        %332 = vperm.xlu0 %331, %v268
        %v333 = vpop.permute.xlu0 %332
        %336 = vset.pattern.permute.xlu0 0
        %337 = vperm.xlu0 %336, %v269
        %v338 = vpop.permute.xlu0 %337
        %341 = vset.pattern.permute.xlu0 0
        %342 = vperm.xlu0 %341, %v270
        %v343 = vpop.permute.xlu0 %342
        %346 = vset.pattern.permute.xlu0 0
        %347 = vperm.xlu0 %346, %v271
        %v348 = vpop.permute.xlu0 %347
        %351 = vset.pattern.permute.xlu0 0
        %352 = vperm.xlu0 %351, %v272
        %v353 = vpop.permute.xlu0 %352
        %356 = vset.pattern.permute.xlu0 0
        %357 = vperm.xlu0 %356, %v273
        %v358 = vpop.permute.xlu0 %357
        %v360 = vperm.slane %v279, 0
        %v361 = vsub.f32 %v283, %v360
        %v362 = vsub.f32 %v288, %v360
        %v363 = vsub.f32 %v293, %v360
        %v364 = vsub.f32 %v298, %v360
        %v365 = vsub.f32 %v303, %v360
        %v366 = vsub.f32 %v308, %v360
        %v367 = vsub.f32 %v313, %v360
        %v368 = vsub.f32 %v318, %v360
        %v369 = vsub.f32 %v323, %v360
        %v370 = vsub.f32 %v328, %v360
        %v371 = vsub.f32 %v333, %v360
        %v372 = vsub.f32 %v338, %v360
        %v373 = vsub.f32 %v343, %v360
        %v374 = vsub.f32 %v348, %v360
        %v375 = vsub.f32 %v353, %v360
        %v376 = vsub.f32 %v358, %v360
        %377 = vset.pattern.permute.xlu0 1
        %378 = vperm.xlu0 %377, %v258
        %v379 = vpop.permute.xlu0 %378
        %381 = vset.pattern.permute.xlu0 1
        %382 = vperm.xlu0 %381, %v259
        %v383 = vpop.permute.xlu0 %382
        %385 = vset.pattern.permute.xlu0 1
        %386 = vperm.xlu0 %385, %v260
        %v387 = vpop.permute.xlu0 %386
        %389 = vset.pattern.permute.xlu0 1
        %390 = vperm.xlu0 %389, %v261
        %v391 = vpop.permute.xlu0 %390
        %393 = vset.pattern.permute.xlu0 1
        %394 = vperm.xlu0 %393, %v262
        %v395 = vpop.permute.xlu0 %394
        %397 = vset.pattern.permute.xlu0 1
        %398 = vperm.xlu0 %397, %v263
        %v399 = vpop.permute.xlu0 %398
        %401 = vset.pattern.permute.xlu0 1
        %402 = vperm.xlu0 %401, %v264
        %v403 = vpop.permute.xlu0 %402
        %405 = vset.pattern.permute.xlu0 1
        %406 = vperm.xlu0 %405, %v265
        %v407 = vpop.permute.xlu0 %406
        %409 = vset.pattern.permute.xlu0 1
        %410 = vperm.xlu0 %409, %v266
        %v411 = vpop.permute.xlu0 %410
        %413 = vset.pattern.permute.xlu0 1
        %414 = vperm.xlu0 %413, %v267
        %v415 = vpop.permute.xlu0 %414
        %417 = vset.pattern.permute.xlu0 1
        %418 = vperm.xlu0 %417, %v268
        %v419 = vpop.permute.xlu0 %418
        %421 = vset.pattern.permute.xlu0 1
        %422 = vperm.xlu0 %421, %v269
        %v423 = vpop.permute.xlu0 %422
        %425 = vset.pattern.permute.xlu0 1
        %426 = vperm.xlu0 %425, %v270
        %v427 = vpop.permute.xlu0 %426
        %429 = vset.pattern.permute.xlu0 1
        %430 = vperm.xlu0 %429, %v271
        %v431 = vpop.permute.xlu0 %430
        %433 = vset.pattern.permute.xlu0 1
        %434 = vperm.xlu0 %433, %v272
        %v435 = vpop.permute.xlu0 %434
        %437 = vset.pattern.permute.xlu0 1
        %438 = vperm.xlu0 %437, %v273
        %v439 = vpop.permute.xlu0 %438
        %v441 = vperm.slane %v279, 1
        %v442 = vsub.f32 %v379, %v441
        %v443 = vsub.f32 %v383, %v441
        %v444 = vsub.f32 %v387, %v441
        %v445 = vsub.f32 %v391, %v441
        %v446 = vsub.f32 %v395, %v441
        %v447 = vsub.f32 %v399, %v441
        %v448 = vsub.f32 %v403, %v441
        %v449 = vsub.f32 %v407, %v441
        %v450 = vsub.f32 %v411, %v441
        %v451 = vsub.f32 %v415, %v441
        %v452 = vsub.f32 %v419, %v441
        %v453 = vsub.f32 %v423, %v441
        %v454 = vsub.f32 %v427, %v441
        %v455 = vsub.f32 %v431, %v441
        %v456 = vsub.f32 %v435, %v441
        %v457 = vsub.f32 %v439, %v441
        %458 = vset.pattern.permute.xlu0 2
        %459 = vperm.xlu0 %458, %v258
        %v460 = vpop.permute.xlu0 %459
        %462 = vset.pattern.permute.xlu0 2
        %463 = vperm.xlu0 %462, %v259
        %v464 = vpop.permute.xlu0 %463
        %466 = vset.pattern.permute.xlu0 2
        %467 = vperm.xlu0 %466, %v260
        %v468 = vpop.permute.xlu0 %467
        %470 = vset.pattern.permute.xlu0 2
        %471 = vperm.xlu0 %470, %v261
        %v472 = vpop.permute.xlu0 %471
        %474 = vset.pattern.permute.xlu0 2
        %475 = vperm.xlu0 %474, %v262
        %v476 = vpop.permute.xlu0 %475
        %478 = vset.pattern.permute.xlu0 2
        %479 = vperm.xlu0 %478, %v263
        %v480 = vpop.permute.xlu0 %479
        %482 = vset.pattern.permute.xlu0 2
        %483 = vperm.xlu0 %482, %v264
        %v484 = vpop.permute.xlu0 %483
        %486 = vset.pattern.permute.xlu0 2
        %487 = vperm.xlu0 %486, %v265
        %v488 = vpop.permute.xlu0 %487
        %490 = vset.pattern.permute.xlu0 2
        %491 = vperm.xlu0 %490, %v266
        %v492 = vpop.permute.xlu0 %491
        %494 = vset.pattern.permute.xlu0 2
        %495 = vperm.xlu0 %494, %v267
        %v496 = vpop.permute.xlu0 %495
        %498 = vset.pattern.permute.xlu0 2
        %499 = vperm.xlu0 %498, %v268
        %v500 = vpop.permute.xlu0 %499
        %502 = vset.pattern.permute.xlu0 2
        %503 = vperm.xlu0 %502, %v269
        %v504 = vpop.permute.xlu0 %503
        %506 = vset.pattern.permute.xlu0 2
        %507 = vperm.xlu0 %506, %v270
        %v508 = vpop.permute.xlu0 %507
        %510 = vset.pattern.permute.xlu0 2
        %511 = vperm.xlu0 %510, %v271
        %v512 = vpop.permute.xlu0 %511
        %514 = vset.pattern.permute.xlu0 2
        %515 = vperm.xlu0 %514, %v272
        %v516 = vpop.permute.xlu0 %515
        %518 = vset.pattern.permute.xlu0 2
        %519 = vperm.xlu0 %518, %v273
        %v520 = vpop.permute.xlu0 %519
        %v522 = vperm.slane %v279, 2
        %v523 = vsub.f32 %v460, %v522
        %v524 = vsub.f32 %v464, %v522
        %v525 = vsub.f32 %v468, %v522
        %v526 = vsub.f32 %v472, %v522
        %v527 = vsub.f32 %v476, %v522
        %v528 = vsub.f32 %v480, %v522
        %v529 = vsub.f32 %v484, %v522
        %v530 = vsub.f32 %v488, %v522
        %v531 = vsub.f32 %v492, %v522
        %v532 = vsub.f32 %v496, %v522
        %v533 = vsub.f32 %v500, %v522
        %v534 = vsub.f32 %v504, %v522
        %v535 = vsub.f32 %v508, %v522
        %v536 = vsub.f32 %v512, %v522
        %v537 = vsub.f32 %v516, %v522
        %v538 = vsub.f32 %v520, %v522
        %v539 = vmul.f32 %v361, %v361
        %v540 = vmul.f32 %v362, %v362
        %v541 = vmul.f32 %v363, %v363
        %v542 = vmul.f32 %v364, %v364
        %v543 = vmul.f32 %v365, %v365
        %v544 = vmul.f32 %v366, %v366
        %v545 = vmul.f32 %v367, %v367
        %v546 = vmul.f32 %v368, %v368
        %v547 = vmul.f32 %v369, %v369
        %v548 = vmul.f32 %v370, %v370
        %v549 = vmul.f32 %v371, %v371
        %v550 = vmul.f32 %v372, %v372
        %v551 = vmul.f32 %v373, %v373
        %v552 = vmul.f32 %v374, %v374
        %v553 = vmul.f32 %v375, %v375
        %v554 = vmul.f32 %v376, %v376
        %v555 = vmul.f32 %v442, %v442
        %v556 = vmul.f32 %v443, %v443
        %v557 = vmul.f32 %v444, %v444
        %v558 = vmul.f32 %v445, %v445
        %v559 = vmul.f32 %v446, %v446
        %v560 = vmul.f32 %v447, %v447
        %v561 = vmul.f32 %v448, %v448
        %v562 = vmul.f32 %v449, %v449
        %v563 = vmul.f32 %v450, %v450
        %v564 = vmul.f32 %v451, %v451
        %v565 = vmul.f32 %v452, %v452
        %v566 = vmul.f32 %v453, %v453
        %v567 = vmul.f32 %v454, %v454
        %v568 = vmul.f32 %v455, %v455
        %v569 = vmul.f32 %v456, %v456
        %v570 = vmul.f32 %v457, %v457
        %v571 = vadd.f32 %v539, %v555
        %v572 = vadd.f32 %v540, %v556
        %v573 = vadd.f32 %v541, %v557
        %v574 = vadd.f32 %v542, %v558
        %v575 = vadd.f32 %v543, %v559
        %v576 = vadd.f32 %v544, %v560
        %v577 = vadd.f32 %v545, %v561
        %v578 = vadd.f32 %v546, %v562
        %v579 = vadd.f32 %v547, %v563
        %v580 = vadd.f32 %v548, %v564
        %v581 = vadd.f32 %v549, %v565
        %v582 = vadd.f32 %v550, %v566
        %v583 = vadd.f32 %v551, %v567
        %v584 = vadd.f32 %v552, %v568
        %v585 = vadd.f32 %v553, %v569
        %v586 = vadd.f32 %v554, %v570
        %v587 = vmul.f32 %v523, %v523
        %v588 = vmul.f32 %v524, %v524
        %v589 = vmul.f32 %v525, %v525
        %v590 = vmul.f32 %v526, %v526
        %v591 = vmul.f32 %v527, %v527
        %v592 = vmul.f32 %v528, %v528
        %v593 = vmul.f32 %v529, %v529
        %v594 = vmul.f32 %v530, %v530
        %v595 = vmul.f32 %v531, %v531
        %v596 = vmul.f32 %v532, %v532
        %v597 = vmul.f32 %v533, %v533
        %v598 = vmul.f32 %v534, %v534
        %v599 = vmul.f32 %v535, %v535
        %v600 = vmul.f32 %v536, %v536
        %v601 = vmul.f32 %v537, %v537
        %v602 = vmul.f32 %v538, %v538
        %v603 = vadd.f32 %v571, %v587
        %v604 = vadd.f32 %v572, %v588
        %v605 = vadd.f32 %v573, %v589
        %v606 = vadd.f32 %v574, %v590
        %v607 = vadd.f32 %v575, %v591
        %v608 = vadd.f32 %v576, %v592
        %v609 = vadd.f32 %v577, %v593
        %v610 = vadd.f32 %v578, %v594
        %v611 = vadd.f32 %v579, %v595
        %v612 = vadd.f32 %v580, %v596
        %v613 = vadd.f32 %v581, %v597
        %v614 = vadd.f32 %v582, %v598
        %v615 = vadd.f32 %v583, %v599
        %v616 = vadd.f32 %v584, %v600
        %v617 = vadd.f32 %v585, %v601
        %v618 = vadd.f32 %v586, %v602
        %v619 = vmin.f32 %v603, %v607
        %v620 = vmin.f32 %v604, %v608
        %v621 = vmin.f32 %v605, %v609
        %v622 = vmin.f32 %v606, %v610
        %v623 = vmin.f32 %v619, %v611
        %v624 = vmin.f32 %v620, %v612
        %v625 = vmin.f32 %v621, %v613
        %v626 = vmin.f32 %v622, %v614
        %v627 = vmin.f32 %v623, %v615
        %v628 = vmin.f32 %v624, %v616
        %v629 = vmin.f32 %v625, %v617
        %v630 = vmin.f32 %v626, %v618
        %v631 = vmin.f32 %v627, %v628
        %v632 = vmin.f32 %v629, %v630
        %v633 = vmin.f32 %v631, %v632
        %v634 = vrot.slane %v633, 4
        %v635 = vmin.f32 %v633, %v634
        %v636 = vrot.slane %v635, 2
        %v637 = vmin.f32 %v635, %v636
        %v638 = vrot.slane %v637, 1
        %v639 = vmin.f32 %v637, %v638
        %v640 = vld [vmem:[%s229] sm:$0x1]
        %v641 = vmin.f32 %v640, %v639
        %642 = vst [vmem:[%s229] sm:$0x1] %v641
        %643 = vmin.xlane.f32.xlu0 %v603
        %v644 = vpop.xlane.xlu0 %643
        %645 = vmin.xlane.f32.xlu0 %v604
        %v646 = vpop.xlane.xlu0 %645
        %647 = vmin.xlane.f32.xlu0 %v605
        %v648 = vpop.xlane.xlu0 %647
        %649 = vmin.xlane.f32.xlu0 %v606
        %v650 = vpop.xlane.xlu0 %649
        %651 = vmin.xlane.f32.xlu0 %v607
        %v652 = vpop.xlane.xlu0 %651
        %653 = vmin.xlane.f32.xlu0 %v608
        %v654 = vpop.xlane.xlu0 %653
        %655 = vmin.xlane.f32.xlu0 %v609
        %v656 = vpop.xlane.xlu0 %655
        %657 = vmin.xlane.f32.xlu0 %v610
        %v658 = vpop.xlane.xlu0 %657
        %659 = vmin.xlane.f32.xlu0 %v611
        %v660 = vpop.xlane.xlu0 %659
        %661 = vmin.xlane.f32.xlu0 %v612
        %v662 = vpop.xlane.xlu0 %661
        %663 = vmin.xlane.f32.xlu0 %v613
        %v664 = vpop.xlane.xlu0 %663
        %665 = vmin.xlane.f32.xlu0 %v614
        %v666 = vpop.xlane.xlu0 %665
        %667 = vmin.xlane.f32.xlu0 %v615
        %v668 = vpop.xlane.xlu0 %667
        %669 = vmin.xlane.f32.xlu0 %v616
        %v670 = vpop.xlane.xlu0 %669
        %671 = vmin.xlane.f32.xlu0 %v617
        %v672 = vpop.xlane.xlu0 %671
        %673 = vmin.xlane.f32.xlu0 %v618
        %v674 = vpop.xlane.xlu0 %673
        %vm675 = vcmask 7168
        %676 = vst.msk [vmem:[%s255] sm:$0xff] %vm675, %v644
        %677 = vst.msk [vmem:[%s255 + $0x8] sm:$0xff] %vm675, %v646
        %678 = vst.msk [vmem:[%s255 + $0x10] sm:$0xff] %vm675, %v648
        %679 = vst.msk [vmem:[%s255 + $0x18] sm:$0xff] %vm675, %v650
        %680 = vst.msk [vmem:[%s255 + $0x20] sm:$0xff] %vm675, %v652
        %681 = vst.msk [vmem:[%s255 + $0x28] sm:$0xff] %vm675, %v654
        %682 = vst.msk [vmem:[%s255 + $0x30] sm:$0xff] %vm675, %v656
        %683 = vst.msk [vmem:[%s255 + $0x38] sm:$0xff] %vm675, %v658
        %684 = vst.msk [vmem:[%s255 + $0x40] sm:$0xff] %vm675, %v660
        %685 = vst.msk [vmem:[%s255 + $0x48] sm:$0xff] %vm675, %v662
        %686 = vst.msk [vmem:[%s255 + $0x50] sm:$0xff] %vm675, %v664
        %687 = vst.msk [vmem:[%s255 + $0x58] sm:$0xff] %vm675, %v666
        %688 = vst.msk [vmem:[%s255 + $0x60] sm:$0xff] %vm675, %v668
        %689 = vst.msk [vmem:[%s255 + $0x68] sm:$0xff] %vm675, %v670
        %690 = vst.msk [vmem:[%s255 + $0x70] sm:$0xff] %vm675, %v672
        %691 = vst.msk [vmem:[%s255 + $0x78] sm:$0xff] %vm675, %v674
        %s692 = sadd.s32 %s24, %s25
        %s693 = smul.u32 16, %s692
        %p694 = scmp.lt.s32.totalorder %s23, 1
        %s695 = scalar_select %p694, %s23, 1
        %p696 = scmp.lt.s32.totalorder %s693, 15
        %s697 = scalar_select %p696, %s693, 15
        %s698 = smul.addr %s695, 16
        %s699 = sadd.s32 %s697, %s698
        %s700 = smul.addr %s699, 8
        %s701 = scalar_lea.vmem %s2, %s700
        %s702 = sand.u32 %s133, 1
        %s703 = scalar_lea.sflag [#allocation3], %s702
        %s704 = sand.u32 %s133, 1
        %s705 = scalar_lea.vmem [#allocation2], %s704
        // Predicated region
        $region33: #{tpu_custom_call.1} parent=27 // pred_check
          %p706 = pneg %p115
        $region34: #{tpu_custom_call.1} parent=27 // pred_check_branch
          %708 = sbr.rel (%p706) target = $region36
        $region35: #{tpu_custom_call.1} parent=27 // pred_region
          %s709 = sadd.s32 %s24, %s25
          %s710 = smul.u32 16, %s709
        $region36: #{tpu_custom_call.1} parent=27 // pred_fallthru
          _
        // Predicated region
        $region37: #{tpu_custom_call.1} parent=27 // pred_check
          %p711 = pneg %p143
        $region38: #{tpu_custom_call.1} parent=27 // pred_check_branch
          %713 = sbr.rel (%p711) target = $region40
        $region39: #{tpu_custom_call.1} parent=27 // pred_region
          %715 = vsyncadd %s703, 0
          %s716 = sadd.s32 %s24, %s23
          %s717 = scalar_lea.hbm %s3, %s716
          %s719 = sshll.u32 %s705, 4
          %s720 = int_to_ptr.vmem [resolvable:$true] %s719
          %s721 = sshll.u32 %s717, 4
          %s722 = int_to_ptr.hbm [resolvable:$true] %s721
          %724 = dma.vmem_to_hbm [thread:$0]  %s720, 16, %s722, %s703
        $region40: #{tpu_custom_call.1} parent=27 // pred_fallthru
          _
      $region28: #{tpu_custom_call.1} parent=5 // pred_fallthru
        _
      %p725 = scmp.le.s32.totalorder 2, %s13
      // Predicated region
      $region41: #{tpu_custom_call.1} parent=5 // pred_check
        %p726 = pneg %p725
      $region42: #{tpu_custom_call.1} parent=5 // pred_check_branch
        %728 = sbr.rel (%p726) target = $region44
      $region43: #{tpu_custom_call.1} parent=5 // pred_region
        %s729 = ssub.s32 %s13, 2
        // Predicated region
        $region45: #{tpu_custom_call.1} parent=43 // pred_check
          %p730 = pneg %p121
        $region46: #{tpu_custom_call.1} parent=43 // pred_check_branch
          %732 = sbr.rel (%p730) target = $region48
        $region47: #{tpu_custom_call.1} parent=43 // pred_region
          %s733 = sadd.s32 %s27, %s28
          %s734 = smul.u32 16, %s733
          %p735 = scmp.lt.s32.totalorder %s26, 1
          %s736 = scalar_select %p735, %s26, 1
          %p737 = scmp.lt.s32.totalorder %s734, 15
          %s738 = scalar_select %p737, %s734, 15
          %s739 = smul.addr %s736, 16
          %s740 = sadd.s32 %s738, %s739
          %s741 = smul.addr %s740, 8
          %s742 = scalar_lea.vmem %s2, %s741
        $region48: #{tpu_custom_call.1} parent=43 // pred_fallthru
          _
        // Predicated region
        $region49: #{tpu_custom_call.1} parent=43 // pred_check
          %p743 = pneg %p149
        $region50: #{tpu_custom_call.1} parent=43 // pred_check_branch
          %745 = sbr.rel (%p743) target = $region52
        $region51: #{tpu_custom_call.1} parent=43 // pred_region
          %s746 = sand.u32 %s134, 1
          %s747 = scalar_lea.sflag [#allocation3], %s746
          %s748 = sand.u32 %s134, 1
          %s749 = scalar_lea.vmem [#allocation2], %s748
          %751 = dma.done %s747, 16
        $region52: #{tpu_custom_call.1} parent=43 // pred_fallthru
          _
      $region44: #{tpu_custom_call.1} parent=5 // pred_fallthru
        _
    $region6: #{tpu_custom_call.1} parent=1 // loop_footer
      %s17 = sadd.s32 1, %s13
    $region7: #{tpu_custom_call.1} parent=1 // loop_footer_branch
      %12 = sbr.rel target = $region3
    $region8: #{tpu_custom_call.1} parent=1 // loop_exit
      _
    %752 = vsyncpa [#allocation3], 1
    %s753 = scalar_lea.sflag [#allocation3], 1
    %754 = vsyncpa %s753, 1

</llo_original>
